<compile_context>
chip_gen: v7x
topology: tpu7x:2x2x1
jax: 0.10.0
libtpu: 0.0.40
codegen_flags: <defaults>
</compile_context>

<pallas_src>
import functools

import jax
import jax.numpy as jnp
from jax import lax
from jax.experimental import pallas as pl
from jax.experimental.pallas import tpu as pltpu

# Module hyper-parameters (DiceCrossEntropyLoss.__init__ defaults except num_classes).
NUM_CLASSES = 4
ALPHA = 0.5
EPS = 1e-6
LABEL_SMOOTHING = 0.1


def _dice_ce_kernel(lab_ref, yp_ref, inter_ref, union_ref, ce_ref, *,
                    num_classes, label_smoothing):
    """Grid = (N, num_t).  Per (sample, spatial tile) accumulate per-class dice partials
    and per-sample CE partials into lane-resident output blocks."""
    t = pl.program_id(1)                     # spatial tile index (reduction axis, last)
    C = num_classes

    @pl.when(t == 0)
    def _():
        inter_ref[...] = jnp.zeros_like(inter_ref)
        union_ref[...] = jnp.zeros_like(union_ref)
        ce_ref[...] = jnp.zeros_like(ce_ref)

    lab = lab_ref[0]                         # (RT, 128) int32 class labels
    valid = lab < C                          # padded pixels carry sentinel == C

    # Per-class logits, cast to f32 per tile (HBM side stays in the caller's dtype).
    z = [yp_ref[0, c].astype(jnp.float32) for c in range(C)]   # each (RT, 128)

    # Class-axis max as elementwise VPU ops over full (8,128)-dense vregs.
    m = z[0]
    for c in range(1, C):
        m = jnp.maximum(m, z[c])
    z = [zc - m for zc in z]                 # shifted logits, z_c <= 0, == 0 at the max

    sum_exp = jnp.zeros_like(m)
    sum_z = jnp.zeros_like(m)
    for zc in z:
        sum_exp = sum_exp + jnp.exp(zc)
        sum_z = sum_z + zc
    lse = jnp.log(sum_exp)

    # Shifted logit at the target label (one-hot targets -> a single select per class).
    z_at_label = jnp.zeros_like(m)
    for c in range(C):
        z_at_label = jnp.where(lab == c, z[c], z_at_label)

    # Label-smoothed CE folded analytically (smoothed targets sum to 1):
    #   -sum_c t_c * logp_c = lse - (1-ls)*z_label - (ls/C)*sum_c z_c
    ce_pix = (lse
              - (1.0 - label_smoothing) * z_at_label
              - (label_smoothing / C) * sum_z)
    ce_pix = jnp.where(valid, ce_pix, 0.0)
    ce_ref[...] += jnp.sum(ce_pix, axis=0, keepdims=True).reshape(1, 1, 128)

    # Hard argmax with first-index tie-break (z_c == 0 iff class c attains the max).
    arg = jnp.zeros_like(lab)
    for c in reversed(range(C)):
        arg = jnp.where(z[c] >= 0.0, c, arg)

    # Per-class dice partials, reduced over the sublane axis only (lane accumulators).
    inter_rows = []
    union_rows = []
    for c in range(C):
        true_c = jnp.where(lab == c, 1.0, 0.0)                  # sentinel never matches
        pred_c = jnp.where((arg == c) & valid, 1.0, 0.0)
        inter_rows.append(jnp.sum(true_c * pred_c, axis=0, keepdims=True))   # (1, 128)
        union_rows.append(jnp.sum(true_c + pred_c, axis=0, keepdims=True))   # (1, 128)
    inter_ref[...] += jnp.concatenate(inter_rows, axis=0).reshape(1, C, 128)
    union_ref[...] += jnp.concatenate(union_rows, axis=0).reshape(1, C, 128)


def dice_cross_entropy_loss_from_labels(labels, logits, *, alpha=ALPHA, eps=EPS,
                                        label_smoothing=LABEL_SMOOTHING,
                                        target_block_bytes=2 << 20):
    """labels: (N, HW) int32 class indices; logits: (N, C, HW) in their native dtype."""
    N, C, HW = logits.shape
    itemsize = jnp.dtype(logits.dtype).itemsize

    # Spatial layout: rows of 128 lanes; tile rows by a byte budget on the logits block.
    R = -(-HW // 128)
    max_rt = max(8, target_block_bytes // (C * 128 * itemsize))
    if R <= max_rt:
        rt = R                               # single spatial tile; full-dim block is legal
        r_pad = R
    else:
        rt = max(8, (max_rt // 8) * 8)       # (8,128)-aligned tile
        r_pad = -(-R // rt) * rt
    hw_pad = r_pad * 128
    num_t = r_pad // rt

    if hw_pad != HW:                         # ragged tail: sentinel labels + zero logits
        labels = jnp.pad(labels, ((0, 0), (0, hw_pad - HW)), constant_values=C)
        logits = jnp.pad(logits, ((0, 0), (0, 0), (0, hw_pad - HW)))
    lab = labels.reshape(N, r_pad, 128)
    lgt = logits.reshape(N, C, r_pad, 128)

    kernel = functools.partial(_dice_ce_kernel, num_classes=C,
                               label_smoothing=float(label_smoothing))

    inter, union, ce = pl.pallas_call(
        kernel,
        out_shape=(jax.ShapeDtypeStruct((N, C, 128), jnp.float32),   # per-class intersection
                   jax.ShapeDtypeStruct((N, C, 128), jnp.float32),   # per-class union
                   jax.ShapeDtypeStruct((N, 1, 128), jnp.float32)),  # per-sample CE sum
        grid_spec=pltpu.PrefetchScalarGridSpec(
            num_scalar_prefetch=0,
            grid=(N, num_t),
            in_specs=[pl.BlockSpec((1, rt, 128), lambda n, t: (n, t, 0)),
                      pl.BlockSpec((1, C, rt, 128), lambda n, t: (n, 0, t, 0))],
            out_specs=[pl.BlockSpec((1, C, 128), lambda n, t: (n, 0, 0)),
                       pl.BlockSpec((1, C, 128), lambda n, t: (n, 0, 0)),
                       pl.BlockSpec((1, 1, 128), lambda n, t: (n, 0, 0))]),
        compiler_params=pltpu.CompilerParams(
            dimension_semantics=("parallel", "arbitrary")),
    )(lab, lgt)

    # Tiny final reductions / combine in XLA.
    inter_nc = jnp.sum(inter, axis=-1)                              # (N, C)
    union_nc = jnp.sum(union, axis=-1)                              # (N, C)
    dice = jnp.clip((2.0 * inter_nc + eps) / (union_nc + eps), 0.0, 1.0)
    dice_loss = jnp.mean(1.0 - dice)                                # mean over (N, C)
    ce_loss = jnp.sum(ce) / (N * HW)                                # mean over (N, H, W)
    return alpha * dice_loss + (1.0 - alpha) * ce_loss


def dice_cross_entropy_loss(y_true, y_pred, *, alpha=ALPHA, eps=EPS,
                            label_smoothing=LABEL_SMOOTHING, target_block_bytes=2 << 20):
    """Module-parity adapter: y_true (N, C, H, W) one-hot targets, y_pred (N, C, H, W) logits.
    Callers that already hold integer labels should call dice_cross_entropy_loss_from_labels
    directly to avoid streaming the dense one-hot tensor at all."""
    N, C, H, W = y_pred.shape
    labels = jnp.argmax(y_true, axis=1).astype(jnp.int32).reshape(N, H * W)
    return dice_cross_entropy_loss_from_labels(
        labels, y_pred.reshape(N, C, H * W), alpha=alpha, eps=eps,
        label_smoothing=label_smoothing, target_block_bytes=target_block_bytes)


def _reference(y_true, y_pred, num_classes, alpha=ALPHA, eps=EPS, ls=LABEL_SMOOTHING):
    """Pure-JAX mirror of the PyTorch DiceCrossEntropyLoss forward (num_classes > 1)."""
    yt = y_true.astype(jnp.float32)
    yp = y_pred.astype(jnp.float32)
    pred_cls = jnp.argmax(yp, axis=1)                                       # (N, H, W)
    onehot = jax.nn.one_hot(pred_cls, num_classes, axis=1, dtype=jnp.float32)
    inter = jnp.sum(yt * onehot, axis=(2, 3))                               # (N, C)
    union = jnp.sum(yt, axis=(2, 3)) + jnp.sum(onehot, axis=(2, 3))         # (N, C)
    dice = jnp.clip((2.0 * inter + eps) / (union + eps), 0.0, 1.0)
    dice_loss = jnp.mean(1.0 - dice)
    logp = jax.nn.log_softmax(yp, axis=1)
    target = yt * (1.0 - ls) + ls / num_classes
    ce = jnp.mean(-jnp.sum(target * logp, axis=1))
    return alpha * dice_loss + (1.0 - alpha) * ce


if __name__ == "__main__":
    key = jax.random.PRNGKey(0)
    k1, k2 = jax.random.split(key)
    N, C, H, W = 2, NUM_CLASSES, 16, 16
    y_pred = jax.random.normal(k1, (N, C, H, W), dtype=jnp.float32)          # logits
    labels = jax.random.randint(k2, (N, H, W), 0, C, dtype=jnp.int32)
    y_true = jax.nn.one_hot(labels, C, axis=1, dtype=jnp.float32)            # (N, C, H, W)

    # f32 logits path
    loss = dice_cross_entropy_loss(y_true, y_pred)
    jax.block_until_ready(loss)
    ref = _reference(y_true, y_pred, C)
    assert abs(float(loss) - float(ref)) < 1e-4, (float(loss), float(ref))

    # bf16 logits path: HBM traffic stays bf16, math is f32 inside the kernel
    y_pred_bf16 = y_pred.astype(jnp.bfloat16)
    loss_bf = dice_cross_entropy_loss(y_true, y_pred_bf16)
    jax.block_until_ready(loss_bf)
    ref_bf = _reference(y_true, y_pred_bf16.astype(jnp.float32), C)
    assert abs(float(loss_bf) - float(ref_bf)) < 2e-3, (float(loss_bf), float(ref_bf))

    print("KERNEL_OK")
</pallas_src>

<mosaic_0001>
module attributes {stable_mosaic.version = 11 : i64} {
  func.func @_dice_ce_kernel(%arg0: i32, %arg1: i32, %arg2: memref<1x2x128xi32, #tpu.memory_space<vmem>>, %arg3: memref<1x4x2x128xf32, #tpu.memory_space<vmem>>, %arg4: memref<1x4x128xf32, #tpu.memory_space<vmem>>, %arg5: memref<1x4x128xf32, #tpu.memory_space<vmem>>, %arg6: memref<1x1x128xf32, #tpu.memory_space<vmem>>) attributes {dimension_semantics = [#tpu.dimension_semantics<parallel>, #tpu.dimension_semantics<arbitrary>], iteration_bounds = array<i64: 2, 1>, scalar_prefetch = 0 : i64, scratch_operands = 0 : i64, tpu.core_type = #tpu.core_type<tc>, window_params = [{transform_indices = @transform_0, window_bounds = array<i64: 1, 2, 128>}, {transform_indices = @transform_1, window_bounds = array<i64: 1, 4, 2, 128>}, {transform_indices = @transform_2, window_bounds = array<i64: 1, 4, 128>}, {transform_indices = @transform_3, window_bounds = array<i64: 1, 4, 128>}, {transform_indices = @transform_4, window_bounds = array<i64: 1, 1, 128>}]} {
    %c0_i32 = arith.constant 0 : i32
    %0 = arith.cmpi eq, %arg1, %c0_i32 : i32
    %1 = arith.extui %0 : i1 to i32
    %c0_i32_0 = arith.constant 0 : i32
    %2 = arith.cmpi ne, %1, %c0_i32_0 : i32
    scf.if %2 {
      %cst_82 = arith.constant 0.000000e+00 : f32
      %159 = vector.broadcast %cst_82 : f32 to vector<1x4x128xf32>
      %c0_83 = arith.constant 0 : index
      %c0_84 = arith.constant 0 : index
      %c0_85 = arith.constant 0 : index
      %160 = vector.load %arg4[%c0_83, %c0_84, %c0_85] : memref<1x4x128xf32, #tpu.memory_space<vmem>>, vector<1x4x128xf32>
      tpu.vector_store %arg4[%c0_83, %c0_84, %c0_85], %159 {strides = array<i32>} : memref<1x4x128xf32, #tpu.memory_space<vmem>>, vector<1x4x128xf32>,
      %cst_86 = arith.constant 0.000000e+00 : f32
      %161 = vector.broadcast %cst_86 : f32 to vector<1x4x128xf32>
      %c0_87 = arith.constant 0 : index
      %c0_88 = arith.constant 0 : index
      %c0_89 = arith.constant 0 : index
      %162 = vector.load %arg5[%c0_87, %c0_88, %c0_89] : memref<1x4x128xf32, #tpu.memory_space<vmem>>, vector<1x4x128xf32>
      tpu.vector_store %arg5[%c0_87, %c0_88, %c0_89], %161 {strides = array<i32>} : memref<1x4x128xf32, #tpu.memory_space<vmem>>, vector<1x4x128xf32>,
      %cst_90 = arith.constant 0.000000e+00 : f32
      %163 = vector.broadcast %cst_90 : f32 to vector<1x1x128xf32>
      %c0_91 = arith.constant 0 : index
      %c0_92 = arith.constant 0 : index
      %c0_93 = arith.constant 0 : index
      %164 = vector.load %arg6[%c0_91, %c0_92, %c0_93] : memref<1x1x128xf32, #tpu.memory_space<vmem>>, vector<1x1x128xf32>
      tpu.vector_store %arg6[%c0_91, %c0_92, %c0_93], %163 {strides = array<i32>} : memref<1x1x128xf32, #tpu.memory_space<vmem>>, vector<1x1x128xf32>,
    } else {
    }
    %c0 = arith.constant 0 : index
    %c0_1 = arith.constant 0 : index
    %c0_2 = arith.constant 0 : index
    %3 = vector.load %arg2[%c0, %c0_1, %c0_2] : memref<1x2x128xi32, #tpu.memory_space<vmem>>, vector<1x2x128xi32>
    %4 = vector.shape_cast %3 : vector<1x2x128xi32> to vector<2x128xi32>
    %c4_i32 = arith.constant 4 : i32
    %5 = vector.broadcast %c4_i32 : i32 to vector<2x128xi32>
    %6 = arith.cmpi slt, %4, %5 : vector<2x128xi32>
    %c0_3 = arith.constant 0 : index
    %c0_4 = arith.constant 0 : index
    %c0_5 = arith.constant 0 : index
    %c0_6 = arith.constant 0 : index
    %7 = vector.load %arg3[%c0_3, %c0_4, %c0_5, %c0_6] : memref<1x4x2x128xf32, #tpu.memory_space<vmem>>, vector<1x1x2x128xf32>
    %8 = vector.shape_cast %7 : vector<1x1x2x128xf32> to vector<2x128xf32>
    %c0_7 = arith.constant 0 : index
    %c1 = arith.constant 1 : index
    %c0_8 = arith.constant 0 : index
    %c0_9 = arith.constant 0 : index
    %9 = vector.load %arg3[%c0_7, %c1, %c0_8, %c0_9] : memref<1x4x2x128xf32, #tpu.memory_space<vmem>>, vector<1x1x2x128xf32>
    %10 = vector.shape_cast %9 : vector<1x1x2x128xf32> to vector<2x128xf32>
    %c0_10 = arith.constant 0 : index
    %c2 = arith.constant 2 : index
    %c0_11 = arith.constant 0 : index
    %c0_12 = arith.constant 0 : index
    %11 = vector.load %arg3[%c0_10, %c2, %c0_11, %c0_12] : memref<1x4x2x128xf32, #tpu.memory_space<vmem>>, vector<1x1x2x128xf32>
    %12 = vector.shape_cast %11 : vector<1x1x2x128xf32> to vector<2x128xf32>
    %c0_13 = arith.constant 0 : index
    %c3 = arith.constant 3 : index
    %c0_14 = arith.constant 0 : index
    %c0_15 = arith.constant 0 : index
    %13 = vector.load %arg3[%c0_13, %c3, %c0_14, %c0_15] : memref<1x4x2x128xf32, #tpu.memory_space<vmem>>, vector<1x1x2x128xf32>
    %14 = vector.shape_cast %13 : vector<1x1x2x128xf32> to vector<2x128xf32>
    %15 = arith.maximumf %8, %10 : vector<2x128xf32>
    %16 = arith.maximumf %15, %12 : vector<2x128xf32>
    %17 = arith.maximumf %16, %14 : vector<2x128xf32>
    %18 = arith.subf %8, %17 : vector<2x128xf32>
    %19 = arith.subf %10, %17 : vector<2x128xf32>
    %20 = arith.subf %12, %17 : vector<2x128xf32>
    %21 = arith.subf %14, %17 : vector<2x128xf32>
    %cst = arith.constant 0.000000e+00 : f32
    %22 = vector.broadcast %cst : f32 to vector<2x128xf32>
    %cst_16 = arith.constant 0.000000e+00 : f32
    %23 = vector.broadcast %cst_16 : f32 to vector<2x128xf32>
    %24 = math.exp %18 : vector<2x128xf32>
    %25 = arith.addf %22, %24 : vector<2x128xf32>
    %26 = arith.addf %23, %18 : vector<2x128xf32>
    %27 = math.exp %19 : vector<2x128xf32>
    %28 = arith.addf %25, %27 : vector<2x128xf32>
    %29 = arith.addf %26, %19 : vector<2x128xf32>
    %30 = math.exp %20 : vector<2x128xf32>
    %31 = arith.addf %28, %30 : vector<2x128xf32>
    %32 = arith.addf %29, %20 : vector<2x128xf32>
    %33 = math.exp %21 : vector<2x128xf32>
    %34 = arith.addf %31, %33 : vector<2x128xf32>
    %35 = arith.addf %32, %21 : vector<2x128xf32>
    %36 = math.log %34 : vector<2x128xf32>
    %cst_17 = arith.constant 0.000000e+00 : f32
    %37 = vector.broadcast %cst_17 : f32 to vector<2x128xf32>
    %c0_i32_18 = arith.constant 0 : i32
    %38 = vector.broadcast %c0_i32_18 : i32 to vector<2x128xi32>
    %39 = arith.cmpi eq, %4, %38 : vector<2x128xi32>
    %40 = arith.select %39, %18, %37 : vector<2x128xi1>, vector<2x128xf32>
    %c1_i32 = arith.constant 1 : i32
    %41 = vector.broadcast %c1_i32 : i32 to vector<2x128xi32>
    %42 = arith.cmpi eq, %4, %41 : vector<2x128xi32>
    %43 = arith.select %42, %19, %40 : vector<2x128xi1>, vector<2x128xf32>
    %c2_i32 = arith.constant 2 : i32
    %44 = vector.broadcast %c2_i32 : i32 to vector<2x128xi32>
    %45 = arith.cmpi eq, %4, %44 : vector<2x128xi32>
    %46 = arith.select %45, %20, %43 : vector<2x128xi1>, vector<2x128xf32>
    %c3_i32 = arith.constant 3 : i32
    %47 = vector.broadcast %c3_i32 : i32 to vector<2x128xi32>
    %48 = arith.cmpi eq, %4, %47 : vector<2x128xi32>
    %49 = arith.select %48, %21, %46 : vector<2x128xi1>, vector<2x128xf32>
    %cst_19 = arith.constant 0.899999976 : f32
    %50 = vector.broadcast %cst_19 : f32 to vector<2x128xf32>
    %51 = arith.mulf %50, %49 : vector<2x128xf32>
    %52 = arith.subf %36, %51 : vector<2x128xf32>
    %cst_20 = arith.constant 2.500000e-02 : f32
    %53 = vector.broadcast %cst_20 : f32 to vector<2x128xf32>
    %54 = arith.mulf %53, %35 : vector<2x128xf32>
    %55 = arith.subf %52, %54 : vector<2x128xf32>
    %cst_21 = arith.constant 0.000000e+00 : f32
    %56 = vector.broadcast %cst_21 : f32 to vector<2x128xf32>
    %57 = arith.select %6, %55, %56 : vector<2x128xi1>, vector<2x128xf32>
    %c0_22 = arith.constant 0 : index
    %c0_23 = arith.constant 0 : index
    %c0_24 = arith.constant 0 : index
    %58 = vector.load %arg6[%c0_22, %c0_23, %c0_24] : memref<1x1x128xf32, #tpu.memory_space<vmem>>, vector<1x1x128xf32>
    %cst_25 = arith.constant dense<0.000000e+00> : vector<128xf32>
    %59 = vector.multi_reduction <add>, %57, %cst_25 [0] : vector<2x128xf32> to vector<128xf32>
    %60 = vector.shape_cast %59 : vector<128xf32> to vector<1x128xf32>
    %61 = vector.shape_cast %60 : vector<1x128xf32> to vector<1x1x128xf32>
    %62 = arith.addf %58, %61 : vector<1x1x128xf32>
    %c0_26 = arith.constant 0 : index
    %c0_27 = arith.constant 0 : index
    %c0_28 = arith.constant 0 : index
    %63 = vector.load %arg6[%c0_26, %c0_27, %c0_28] : memref<1x1x128xf32, #tpu.memory_space<vmem>>, vector<1x1x128xf32>
    tpu.vector_store %arg6[%c0_26, %c0_27, %c0_28], %62 {strides = array<i32>} : memref<1x1x128xf32, #tpu.memory_space<vmem>>, vector<1x1x128xf32>,
    %c0_i32_29 = arith.constant 0 : i32
    %64 = vector.broadcast %c0_i32_29 : i32 to vector<2x128xi32>
    %cst_30 = arith.constant 0.000000e+00 : f32
    %65 = vector.broadcast %cst_30 : f32 to vector<2x128xf32>
    %66 = arith.cmpf oge, %21, %65 : vector<2x128xf32>
    %c3_i32_31 = arith.constant 3 : i32
    %67 = vector.broadcast %c3_i32_31 : i32 to vector<2x128xi32>
    %68 = arith.select %66, %67, %64 : vector<2x128xi1>, vector<2x128xi32>
    %cst_32 = arith.constant 0.000000e+00 : f32
    %69 = vector.broadcast %cst_32 : f32 to vector<2x128xf32>
    %70 = arith.cmpf oge, %20, %69 : vector<2x128xf32>
    %c2_i32_33 = arith.constant 2 : i32
    %71 = vector.broadcast %c2_i32_33 : i32 to vector<2x128xi32>
    %72 = arith.select %70, %71, %68 : vector<2x128xi1>, vector<2x128xi32>
    %cst_34 = arith.constant 0.000000e+00 : f32
    %73 = vector.broadcast %cst_34 : f32 to vector<2x128xf32>
    %74 = arith.cmpf oge, %19, %73 : vector<2x128xf32>
    %c1_i32_35 = arith.constant 1 : i32
    %75 = vector.broadcast %c1_i32_35 : i32 to vector<2x128xi32>
    %76 = arith.select %74, %75, %72 : vector<2x128xi1>, vector<2x128xi32>
    %cst_36 = arith.constant 0.000000e+00 : f32
    %77 = vector.broadcast %cst_36 : f32 to vector<2x128xf32>
    %78 = arith.cmpf oge, %18, %77 : vector<2x128xf32>
    %c0_i32_37 = arith.constant 0 : i32
    %79 = vector.broadcast %c0_i32_37 : i32 to vector<2x128xi32>
    %80 = arith.select %78, %79, %76 : vector<2x128xi1>, vector<2x128xi32>
    %c0_i32_38 = arith.constant 0 : i32
    %81 = vector.broadcast %c0_i32_38 : i32 to vector<2x128xi32>
    %82 = arith.cmpi eq, %4, %81 : vector<2x128xi32>
    %cst_39 = arith.constant 1.000000e+00 : f32
    %cst_40 = arith.constant 0.000000e+00 : f32
    %83 = vector.broadcast %cst_39 : f32 to vector<2x128xf32>
    %84 = vector.broadcast %cst_40 : f32 to vector<2x128xf32>
    %85 = arith.select %82, %83, %84 : vector<2x128xi1>, vector<2x128xf32>
    %c0_i32_41 = arith.constant 0 : i32
    %86 = vector.broadcast %c0_i32_41 : i32 to vector<2x128xi32>
    %87 = arith.cmpi eq, %80, %86 : vector<2x128xi32>
    %88 = arith.andi %87, %6 : vector<2x128xi1>
    %cst_42 = arith.constant 1.000000e+00 : f32
    %cst_43 = arith.constant 0.000000e+00 : f32
    %89 = vector.broadcast %cst_42 : f32 to vector<2x128xf32>
    %90 = vector.broadcast %cst_43 : f32 to vector<2x128xf32>
    %91 = arith.select %88, %89, %90 : vector<2x128xi1>, vector<2x128xf32>
    %92 = arith.mulf %85, %91 : vector<2x128xf32>
    %cst_44 = arith.constant dense<0.000000e+00> : vector<128xf32>
    %93 = vector.multi_reduction <add>, %92, %cst_44 [0] : vector<2x128xf32> to vector<128xf32>
    %94 = vector.shape_cast %93 : vector<128xf32> to vector<1x128xf32>
    %95 = arith.addf %85, %91 : vector<2x128xf32>
    %cst_45 = arith.constant dense<0.000000e+00> : vector<128xf32>
    %96 = vector.multi_reduction <add>, %95, %cst_45 [0] : vector<2x128xf32> to vector<128xf32>
    %97 = vector.shape_cast %96 : vector<128xf32> to vector<1x128xf32>
    %c1_i32_46 = arith.constant 1 : i32
    %98 = vector.broadcast %c1_i32_46 : i32 to vector<2x128xi32>
    %99 = arith.cmpi eq, %4, %98 : vector<2x128xi32>
    %cst_47 = arith.constant 1.000000e+00 : f32
    %cst_48 = arith.constant 0.000000e+00 : f32
    %100 = vector.broadcast %cst_47 : f32 to vector<2x128xf32>
    %101 = vector.broadcast %cst_48 : f32 to vector<2x128xf32>
    %102 = arith.select %99, %100, %101 : vector<2x128xi1>, vector<2x128xf32>
    %c1_i32_49 = arith.constant 1 : i32
    %103 = vector.broadcast %c1_i32_49 : i32 to vector<2x128xi32>
    %104 = arith.cmpi eq, %80, %103 : vector<2x128xi32>
    %105 = arith.andi %104, %6 : vector<2x128xi1>
    %cst_50 = arith.constant 1.000000e+00 : f32
    %cst_51 = arith.constant 0.000000e+00 : f32
    %106 = vector.broadcast %cst_50 : f32 to vector<2x128xf32>
    %107 = vector.broadcast %cst_51 : f32 to vector<2x128xf32>
    %108 = arith.select %105, %106, %107 : vector<2x128xi1>, vector<2x128xf32>
    %109 = arith.mulf %102, %108 : vector<2x128xf32>
    %cst_52 = arith.constant dense<0.000000e+00> : vector<128xf32>
    %110 = vector.multi_reduction <add>, %109, %cst_52 [0] : vector<2x128xf32> to vector<128xf32>
    %111 = vector.shape_cast %110 : vector<128xf32> to vector<1x128xf32>
    %112 = arith.addf %102, %108 : vector<2x128xf32>
    %cst_53 = arith.constant dense<0.000000e+00> : vector<128xf32>
    %113 = vector.multi_reduction <add>, %112, %cst_53 [0] : vector<2x128xf32> to vector<128xf32>
    %114 = vector.shape_cast %113 : vector<128xf32> to vector<1x128xf32>
    %c2_i32_54 = arith.constant 2 : i32
    %115 = vector.broadcast %c2_i32_54 : i32 to vector<2x128xi32>
    %116 = arith.cmpi eq, %4, %115 : vector<2x128xi32>
    %cst_55 = arith.constant 1.000000e+00 : f32
    %cst_56 = arith.constant 0.000000e+00 : f32
    %117 = vector.broadcast %cst_55 : f32 to vector<2x128xf32>
    %118 = vector.broadcast %cst_56 : f32 to vector<2x128xf32>
    %119 = arith.select %116, %117, %118 : vector<2x128xi1>, vector<2x128xf32>
    %c2_i32_57 = arith.constant 2 : i32
    %120 = vector.broadcast %c2_i32_57 : i32 to vector<2x128xi32>
    %121 = arith.cmpi eq, %80, %120 : vector<2x128xi32>
    %122 = arith.andi %121, %6 : vector<2x128xi1>
    %cst_58 = arith.constant 1.000000e+00 : f32
    %cst_59 = arith.constant 0.000000e+00 : f32
    %123 = vector.broadcast %cst_58 : f32 to vector<2x128xf32>
    %124 = vector.broadcast %cst_59 : f32 to vector<2x128xf32>
    %125 = arith.select %122, %123, %124 : vector<2x128xi1>, vector<2x128xf32>
    %126 = arith.mulf %119, %125 : vector<2x128xf32>
    %cst_60 = arith.constant dense<0.000000e+00> : vector<128xf32>
    %127 = vector.multi_reduction <add>, %126, %cst_60 [0] : vector<2x128xf32> to vector<128xf32>
    %128 = vector.shape_cast %127 : vector<128xf32> to vector<1x128xf32>
    %129 = arith.addf %119, %125 : vector<2x128xf32>
    %cst_61 = arith.constant dense<0.000000e+00> : vector<128xf32>
    %130 = vector.multi_reduction <add>, %129, %cst_61 [0] : vector<2x128xf32> to vector<128xf32>
    %131 = vector.shape_cast %130 : vector<128xf32> to vector<1x128xf32>
    %c3_i32_62 = arith.constant 3 : i32
    %132 = vector.broadcast %c3_i32_62 : i32 to vector<2x128xi32>
    %133 = arith.cmpi eq, %4, %132 : vector<2x128xi32>
    %cst_63 = arith.constant 1.000000e+00 : f32
    %cst_64 = arith.constant 0.000000e+00 : f32
    %134 = vector.broadcast %cst_63 : f32 to vector<2x128xf32>
    %135 = vector.broadcast %cst_64 : f32 to vector<2x128xf32>
    %136 = arith.select %133, %134, %135 : vector<2x128xi1>, vector<2x128xf32>
    %c3_i32_65 = arith.constant 3 : i32
    %137 = vector.broadcast %c3_i32_65 : i32 to vector<2x128xi32>
    %138 = arith.cmpi eq, %80, %137 : vector<2x128xi32>
    %139 = arith.andi %138, %6 : vector<2x128xi1>
    %cst_66 = arith.constant 1.000000e+00 : f32
    %cst_67 = arith.constant 0.000000e+00 : f32
    %140 = vector.broadcast %cst_66 : f32 to vector<2x128xf32>
    %141 = vector.broadcast %cst_67 : f32 to vector<2x128xf32>
    %142 = arith.select %139, %140, %141 : vector<2x128xi1>, vector<2x128xf32>
    %143 = arith.mulf %136, %142 : vector<2x128xf32>
    %cst_68 = arith.constant dense<0.000000e+00> : vector<128xf32>
    %144 = vector.multi_reduction <add>, %143, %cst_68 [0] : vector<2x128xf32> to vector<128xf32>
    %145 = vector.shape_cast %144 : vector<128xf32> to vector<1x128xf32>
    %146 = arith.addf %136, %142 : vector<2x128xf32>
    %cst_69 = arith.constant dense<0.000000e+00> : vector<128xf32>
    %147 = vector.multi_reduction <add>, %146, %cst_69 [0] : vector<2x128xf32> to vector<128xf32>
    %148 = vector.shape_cast %147 : vector<128xf32> to vector<1x128xf32>
    %c0_70 = arith.constant 0 : index
    %c0_71 = arith.constant 0 : index
    %c0_72 = arith.constant 0 : index
    %149 = vector.load %arg4[%c0_70, %c0_71, %c0_72] : memref<1x4x128xf32, #tpu.memory_space<vmem>>, vector<1x4x128xf32>
    %150 = tpu.concatenate %94, %111, %128, %145 in 0 : vector<1x128xf32>, vector<1x128xf32>, vector<1x128xf32>, vector<1x128xf32> -> vector<4x128xf32>
    %151 = vector.shape_cast %150 : vector<4x128xf32> to vector<1x4x128xf32>
    %152 = arith.addf %149, %151 : vector<1x4x128xf32>
    %c0_73 = arith.constant 0 : index
    %c0_74 = arith.constant 0 : index
    %c0_75 = arith.constant 0 : index
    %153 = vector.load %arg4[%c0_73, %c0_74, %c0_75] : memref<1x4x128xf32, #tpu.memory_space<vmem>>, vector<1x4x128xf32>
    tpu.vector_store %arg4[%c0_73, %c0_74, %c0_75], %152 {strides = array<i32>} : memref<1x4x128xf32, #tpu.memory_space<vmem>>, vector<1x4x128xf32>,
    %c0_76 = arith.constant 0 : index
    %c0_77 = arith.constant 0 : index
    %c0_78 = arith.constant 0 : index
    %154 = vector.load %arg5[%c0_76, %c0_77, %c0_78] : memref<1x4x128xf32, #tpu.memory_space<vmem>>, vector<1x4x128xf32>
    %155 = tpu.concatenate %97, %114, %131, %148 in 0 : vector<1x128xf32>, vector<1x128xf32>, vector<1x128xf32>, vector<1x128xf32> -> vector<4x128xf32>
    %156 = vector.shape_cast %155 : vector<4x128xf32> to vector<1x4x128xf32>
    %157 = arith.addf %154, %156 : vector<1x4x128xf32>
    %c0_79 = arith.constant 0 : index
    %c0_80 = arith.constant 0 : index
    %c0_81 = arith.constant 0 : index
    %158 = vector.load %arg5[%c0_79, %c0_80, %c0_81] : memref<1x4x128xf32, #tpu.memory_space<vmem>>, vector<1x4x128xf32>
    tpu.vector_store %arg5[%c0_79, %c0_80, %c0_81], %157 {strides = array<i32>} : memref<1x4x128xf32, #tpu.memory_space<vmem>>, vector<1x4x128xf32>,
    return
  }
  func.func @transform_0(%arg0: i32, %arg1: i32) -> (i32, i32, i32) {
    %c0_i32 = arith.constant 0 : i32
    %c0_i32_0 = arith.constant 0 : i32
    return %arg0, %arg1, %c0_i32 : i32, i32, i32
  }
  func.func @transform_1(%arg0: i32, %arg1: i32) -> (i32, i32, i32, i32) {
    %c0_i32 = arith.constant 0 : i32
    %c0_i32_0 = arith.constant 0 : i32
    %c0_i32_1 = arith.constant 0 : i32
    return %arg0, %c0_i32, %arg1, %c0_i32_0 : i32, i32, i32, i32
  }
  func.func @transform_2(%arg0: i32, %arg1: i32) -> (i32, i32, i32) {
    %c0_i32 = arith.constant 0 : i32
    %c0_i32_0 = arith.constant 0 : i32
    %c0_i32_1 = arith.constant 0 : i32
    return %arg0, %c0_i32, %c0_i32_0 : i32, i32, i32
  }
  func.func @transform_3(%arg0: i32, %arg1: i32) -> (i32, i32, i32) {
    %c0_i32 = arith.constant 0 : i32
    %c0_i32_0 = arith.constant 0 : i32
    %c0_i32_1 = arith.constant 0 : i32
    return %arg0, %c0_i32, %c0_i32_0 : i32, i32, i32
  }
  func.func @transform_4(%arg0: i32, %arg1: i32) -> (i32, i32, i32) {
    %c0_i32 = arith.constant 0 : i32
    %c0_i32_0 = arith.constant 0 : i32
    %c0_i32_1 = arith.constant 0 : i32
    return %arg0, %c0_i32, %c0_i32_0 : i32, i32, i32
  }
}

</mosaic_0001>

<llo_original>
// kernel: tpu_custom_call.1
$region0: #{tpu_custom_call.1}
  #allocation0 [shape = 'u32[]', space=smem, size = 0x4, offset = 0x4, fixed_abs, tag = 'smem constant byte address 0x4 - core index']
  #allocation1 [shape = 'u32[144,128]{1,0:T(1,128)}', space=vmem, size = 0x12000, scoped, tag = 'internal scratch']
  %s0 = inlined_call_operand.hbm [shape: s32[2,2,128], index: 0, kind: input, shape index: {}]
  %s1 = inlined_call_operand.hbm [shape: f32[2,4,2,128], index: 1, kind: input, shape index: {}]
  %s2 = inlined_call_operand.hbm [shape: f32[2,4,128], index: 2, kind: output, shape index: {0}]
  %s3 = inlined_call_operand.hbm [shape: f32[2,4,128], index: 3, kind: output, shape index: {1}]
  %s4 = inlined_call_operand.hbm [shape: f32[2,1,128], index: 4, kind: output, shape index: {2}]
  %5 = xla_tuple %s2, %s3, %s4
  %s6 = sld [smem:[#allocation0]]
  $region69: #{tpu_custom_call.1} parent=0
    _
  %s8 = ssub.s32 1, %s6
  %s9 = scalar_select 0, %s8, %s6
  $region1: #{tpu_custom_call.1} parent=0
    #allocation2 [shape = 'u8[2048]{0}', space=vmem, size = 0x800, scoped, tag = 'input window, operand 0']
    #allocation3 [shape = 's32[2]{0}', space=sflag, size = 0x8, scoped, tag = 'scoped memory for tpu_custom_call.1']
    #allocation4 [shape = 's32[2]{0}', space=sflag, size = 0x8, scoped, tag = 'scoped memory for tpu_custom_call.1']
    #allocation5 [shape = 'u8[8192]{0}', space=vmem, size = 0x2000, scoped, tag = 'input window, operand 1']
    #allocation6 [shape = 's32[2]{0}', space=sflag, size = 0x8, scoped, tag = 'scoped memory for tpu_custom_call.1']
    #allocation7 [shape = 'u8[4096]{0}', space=vmem, size = 0x1000, scoped, tag = 'output window, operand 0']
    #allocation8 [shape = 'u8[4096]{0}', space=vmem, size = 0x1000, scoped, tag = 'output window, operand 1']
    #allocation9 [shape = 's32[2]{0}', space=sflag, size = 0x8, scoped, tag = 'scoped memory for tpu_custom_call.1']
    #allocation10 [shape = 'u8[1024]{0}', space=vmem, size = 0x400, scoped, tag = 'output window, operand 2']
    %10 = vsyncpa [#allocation3], 0
    %s11 = scalar_lea.sflag [#allocation3], 1
    %12 = vsyncpa %s11, 0
    %13 = vsyncpa [#allocation6], 0
    %s14 = scalar_lea.sflag [#allocation6], 1
    %15 = vsyncpa %s14, 0
    %16 = vsyncpa [#allocation4], 0
    %s17 = scalar_lea.sflag [#allocation4], 1
    %18 = vsyncpa %s17, 0
    %19 = vsyncpa [#allocation9], 0
    %s20 = scalar_lea.sflag [#allocation9], 1
    %21 = vsyncpa %s20, 0
    loop: start=0, step=1, limit=4
    $region2: #{tpu_custom_call.1} parent=1 // loop_pre_header
      _
    $region3: #{tpu_custom_call.1} parent=1 // loop_header
      %s23 = sphi 0, %s27
      %p24 = scmp.ge.s32.totalorder %s23, 4
      %s30 = sphi 0, %s42
      %s31 = sphi 0, %s38
      %s32 = sphi 0, %s30
      %s33 = sphi 0, %s31
      %s34 = sphi 0, %s32
      %s35 = sphi 0, %s33
      %s47 = sphi 0, %s49
      %s50 = sphi 0, %s47
      %s51 = sphi 0, %s50
      %s67 = sphi 0, %s51
      %s75 = sphi 0, %s77
      %s78 = sphi 0, %s75
      %s79 = sphi 0, %s78
      %s95 = sphi 0, %s79
      %s101 = sphi 0, %s103
      %s104 = sphi 0, %s101
      %s105 = sphi 0, %s104
      %s121 = sphi 0, %s105
      %s127 = sphi 0, %s129
      %s130 = sphi 0, %s127
      %s131 = sphi 0, %s130
      %s147 = sphi 0, %s131
      %s153 = sphi 0, %s155
      %s156 = sphi 0, %s153
      %s157 = sphi 0, %s156
      %s173 = sphi 0, %s157
    $region4: #{tpu_custom_call.1} parent=1 // loop_header_branch
      %26 = sbr.rel (%p24) target = $region8
    $region5: #{tpu_custom_call.1} parent=1 // loop_body
      %s28 = ssub.s32 %s23, 1
      %s29 = ssub.s32 %s23, 2
      %s36 = sadd.s32 1, %s31
      %p37 = scmp.ge.s32.totalorder %s36, 1
      %s38 = scalar_select %p37, 0, %s36
      %s39 = sadd.s32 1, %s30
      %s40 = scalar_select %p37, %s39, %s30
      %p41 = scmp.ge.s32.totalorder %s40, 2
      %s42 = scalar_select %p41, 0, %s40
      %s43 = ssub.s32 %s30, %s42
      %s44 = ssub.s32 %s31, %s38
      %s45 = sor.u32 %s43, %s44
      %p46 = scmp.eq.s32.totalorder %s45, 0
      %s48 = sadd.s32 %s47, 1
      %s49 = scalar_select %p46, %s47, %s48
      %p52 = pneg %p46
      %p53 = scmp.eq.s32.totalorder %s23, 1
      %p54 = por %p52, %p53
      %p55 = scmp.ne.s32.totalorder %s47, %s50
      %p56 = scmp.eq.s32.totalorder %s23, 0
      %p57 = por %p55, %p56
      %p58 = scmp.ne.s32.totalorder %s47, %s50
      %p59 = scmp.eq.s32.totalorder %s28, 1
      %p60 = por %p58, %p59
      %p61 = scmp.ne.s32.totalorder %s50, %s51
      %p62 = scmp.eq.s32.totalorder %s28, 0
      %p63 = por %p61, %p62
      %p64 = scmp.ne.s32.totalorder %s50, %s51
      %p65 = scmp.eq.s32.totalorder %s29, 1
      %p66 = por %p64, %p65
      %p68 = scmp.ne.s32.totalorder %s51, %s67
      %p69 = scmp.eq.s32.totalorder %s29, 0
      %p70 = por %p68, %p69
      %s71 = ssub.s32 %s30, %s42
      %s72 = ssub.s32 %s31, %s38
      %s73 = sor.u32 %s71, %s72
      %p74 = scmp.eq.s32.totalorder %s73, 0
      %s76 = sadd.s32 %s75, 1
      %s77 = scalar_select %p74, %s75, %s76
      %p80 = pneg %p74
      %p81 = scmp.eq.s32.totalorder %s23, 1
      %p82 = por %p80, %p81
      %p83 = scmp.ne.s32.totalorder %s75, %s78
      %p84 = scmp.eq.s32.totalorder %s23, 0
      %p85 = por %p83, %p84
      %p86 = scmp.ne.s32.totalorder %s75, %s78
      %p87 = scmp.eq.s32.totalorder %s28, 1
      %p88 = por %p86, %p87
      %p89 = scmp.ne.s32.totalorder %s78, %s79
      %p90 = scmp.eq.s32.totalorder %s28, 0
      %p91 = por %p89, %p90
      %p92 = scmp.ne.s32.totalorder %s78, %s79
      %p93 = scmp.eq.s32.totalorder %s29, 1
      %p94 = por %p92, %p93
      %p96 = scmp.ne.s32.totalorder %s79, %s95
      %p97 = scmp.eq.s32.totalorder %s29, 0
      %p98 = por %p96, %p97
      %s99 = ssub.s32 %s30, %s42
      %p100 = scmp.eq.s32.totalorder %s99, 0
      %s102 = sadd.s32 %s101, 1
      %s103 = scalar_select %p100, %s101, %s102
      %p106 = pneg %p100
      %p107 = scmp.eq.s32.totalorder %s23, 1
      %p108 = por %p106, %p107
      %p109 = scmp.ne.s32.totalorder %s101, %s104
      %p110 = scmp.eq.s32.totalorder %s23, 0
      %p111 = por %p109, %p110
      %p112 = scmp.ne.s32.totalorder %s101, %s104
      %p113 = scmp.eq.s32.totalorder %s28, 1
      %p114 = por %p112, %p113
      %p115 = scmp.ne.s32.totalorder %s104, %s105
      %p116 = scmp.eq.s32.totalorder %s28, 0
      %p117 = por %p115, %p116
      %p118 = scmp.ne.s32.totalorder %s104, %s105
      %p119 = scmp.eq.s32.totalorder %s29, 1
      %p120 = por %p118, %p119
      %p122 = scmp.ne.s32.totalorder %s105, %s121
      %p123 = scmp.eq.s32.totalorder %s29, 0
      %p124 = por %p122, %p123
      %s125 = ssub.s32 %s30, %s42
      %p126 = scmp.eq.s32.totalorder %s125, 0
      %s128 = sadd.s32 %s127, 1
      %s129 = scalar_select %p126, %s127, %s128
      %p132 = pneg %p126
      %p133 = scmp.eq.s32.totalorder %s23, 1
      %p134 = por %p132, %p133
      %p135 = scmp.ne.s32.totalorder %s127, %s130
      %p136 = scmp.eq.s32.totalorder %s23, 0
      %p137 = por %p135, %p136
      %p138 = scmp.ne.s32.totalorder %s127, %s130
      %p139 = scmp.eq.s32.totalorder %s28, 1
      %p140 = por %p138, %p139
      %p141 = scmp.ne.s32.totalorder %s130, %s131
      %p142 = scmp.eq.s32.totalorder %s28, 0
      %p143 = por %p141, %p142
      %p144 = scmp.ne.s32.totalorder %s130, %s131
      %p145 = scmp.eq.s32.totalorder %s29, 1
      %p146 = por %p144, %p145
      %p148 = scmp.ne.s32.totalorder %s131, %s147
      %p149 = scmp.eq.s32.totalorder %s29, 0
      %p150 = por %p148, %p149
      %s151 = ssub.s32 %s30, %s42
      %p152 = scmp.eq.s32.totalorder %s151, 0
      %s154 = sadd.s32 %s153, 1
      %s155 = scalar_select %p152, %s153, %s154
      %p158 = pneg %p152
      %p159 = scmp.eq.s32.totalorder %s23, 1
      %p160 = por %p158, %p159
      %p161 = scmp.ne.s32.totalorder %s153, %s156
      %p162 = scmp.eq.s32.totalorder %s23, 0
      %p163 = por %p161, %p162
      %p164 = scmp.ne.s32.totalorder %s153, %s156
      %p165 = scmp.eq.s32.totalorder %s28, 1
      %p166 = por %p164, %p165
      %p167 = scmp.ne.s32.totalorder %s156, %s157
      %p168 = scmp.eq.s32.totalorder %s28, 0
      %p169 = por %p167, %p168
      %p170 = scmp.ne.s32.totalorder %s156, %s157
      %p171 = scmp.eq.s32.totalorder %s29, 1
      %p172 = por %p170, %p171
      %p174 = scmp.ne.s32.totalorder %s157, %s173
      %p175 = scmp.eq.s32.totalorder %s29, 0
      %p176 = por %p174, %p175
      %p177 = scmp.le.s32.totalorder 1, %s23
      %p178 = scmp.lt.s32.totalorder %s23, 3
      %p179 = pnand %p177, %p178
      %p180 = pneg %p179
      // Predicated region
      $region9: #{tpu_custom_call.1} parent=5 // pred_check
        _
      $region10: #{tpu_custom_call.1} parent=5 // pred_check_branch
        %182 = sbr.rel (%p179) target = $region12
      $region11: #{tpu_custom_call.1} parent=5 // pred_region
        %s183 = ssub.s32 %s23, 1
      $region12: #{tpu_custom_call.1} parent=5 // pred_fallthru
        _
      %p184 = scmp.lt.s32.totalorder %s23, 2
      // Predicated region
      $region13: #{tpu_custom_call.1} parent=5 // pred_check
        %p185 = pneg %p184
      $region14: #{tpu_custom_call.1} parent=5 // pred_check_branch
        %187 = sbr.rel (%p185) target = $region16
      $region15: #{tpu_custom_call.1} parent=5 // pred_region
        // Predicated region
        $region17: #{tpu_custom_call.1} parent=15 // pred_check
          %p188 = pneg %p57
        $region18: #{tpu_custom_call.1} parent=15 // pred_check_branch
          %190 = sbr.rel (%p188) target = $region20
        $region19: #{tpu_custom_call.1} parent=15 // pred_region
          %s191 = sand.u32 %s47, 1
          %s192 = scalar_lea.sflag [#allocation3], %s191
          %s193 = sand.u32 %s47, 1
          %s194 = smul.addr %s193, 2
          %s195 = scalar_lea.vmem [#allocation2], %s194
          %s197 = ssub.s32 32, 32
          %198 = vsyncadd %s192, %s197
          %s199 = sadd.s32 %s31, %s30
          %s200 = smul.addr %s199, 32
          %s201 = scalar_lea.hbm %s0, %s200
          %s203 = sshll.u32 %s195, 4
          %s204 = int_to_ptr.vmem [resolvable:$true] %s203
          %206 = dma.hbm_to_vmem [thread:$0]  %s201, 32, %s204, %s192
        $region20: #{tpu_custom_call.1} parent=15 // pred_fallthru
          _
        // Predicated region
        $region21: #{tpu_custom_call.1} parent=15 // pred_check
          %p207 = pneg %p85
        $region22: #{tpu_custom_call.1} parent=15 // pred_check_branch
          %209 = sbr.rel (%p207) target = $region24
        $region23: #{tpu_custom_call.1} parent=15 // pred_region
          %s210 = sand.u32 %s75, 1
          %s211 = scalar_lea.sflag [#allocation6], %s210
          %s212 = sand.u32 %s75, 1
          %s213 = smul.addr %s212, 8
          %s214 = scalar_lea.vmem [#allocation5], %s213
          %s216 = ssub.s32 128, 128
          %217 = vsyncadd %s211, %s216
          %s218 = smul.addr %s30, 4
          %s219 = sadd.s32 %s31, %s218
          %s220 = smul.addr %s219, 32
          %s221 = scalar_lea.hbm %s1, %s220
          %s222 = sshll.u32 %s214, 4
          %s223 = int_to_ptr.vmem [resolvable:$true] %s222
          %228 = dma.hbm_to_vmem [thread:$0]  %s221, 128, %s223, %s211, 32, 32, 2
        $region24: #{tpu_custom_call.1} parent=15 // pred_fallthru
          _
      $region16: #{tpu_custom_call.1} parent=5 // pred_fallthru
        _
      %p229 = scmp.le.s32.totalorder 1, %s23
      %p230 = scmp.lt.s32.totalorder %s23, 3
      %p231 = pnand %p229, %p230
      %p232 = pneg %p231
      // Predicated region
      $region25: #{tpu_custom_call.1} parent=5 // pred_check
        _
      $region26: #{tpu_custom_call.1} parent=5 // pred_check_branch
        %234 = sbr.rel (%p231) target = $region28
      $region27: #{tpu_custom_call.1} parent=5 // pred_region
        %s235 = ssub.s32 %s23, 1
        %s236 = sand.u32 %s50, 1
        %s237 = scalar_lea.sflag [#allocation3], %s236
        %s238 = sand.u32 %s50, 1
        %s239 = smul.addr %s238, 2
        %s240 = scalar_lea.vmem [#allocation2], %s239
        // Predicated region
        $region29: #{tpu_custom_call.1} parent=27 // pred_check
          %p241 = pneg %p63
        $region30: #{tpu_custom_call.1} parent=27 // pred_check_branch
          %243 = sbr.rel (%p241) target = $region32
        $region31: #{tpu_custom_call.1} parent=27 // pred_region
          %244 = dma.done %s237, 32
        $region32: #{tpu_custom_call.1} parent=27 // pred_fallthru
          _
        %s245 = sand.u32 %s78, 1
        %s246 = scalar_lea.sflag [#allocation6], %s245
        %s247 = sand.u32 %s78, 1
        %s248 = smul.addr %s247, 8
        %s249 = scalar_lea.vmem [#allocation5], %s248
        // Predicated region
        $region33: #{tpu_custom_call.1} parent=27 // pred_check
          %p250 = pneg %p91
        $region34: #{tpu_custom_call.1} parent=27 // pred_check_branch
          %252 = sbr.rel (%p250) target = $region36
        $region35: #{tpu_custom_call.1} parent=27 // pred_region
          %253 = dma.done %s246, 128
        $region36: #{tpu_custom_call.1} parent=27 // pred_fallthru
          _
        %s254 = sand.u32 %s50, 1
        %s255 = scalar_lea.sflag [#allocation3], %s254
        %s256 = sand.u32 %s50, 1
        %s257 = smul.addr %s256, 2
        %s258 = scalar_lea.vmem [#allocation2], %s257
        %p259 = pneg %p63
        %p260 = pneg %p60
        %s261 = sand.u32 %s78, 1
        %s262 = scalar_lea.sflag [#allocation6], %s261
        %s263 = sand.u32 %s78, 1
        %s264 = smul.addr %s263, 8
        %s265 = scalar_lea.vmem [#allocation5], %s264
        %p266 = pneg %p91
        %p267 = pneg %p88
        %p268 = pneg %p117
        %p269 = pneg %p114
        %s270 = sand.u32 %s104, 1
        %s271 = scalar_lea.sflag [#allocation4], %s270
        %s272 = sand.u32 %s104, 1
        %s273 = smul.addr %s272, 4
        %s274 = scalar_lea.vmem [#allocation7], %s273
        %p275 = pneg %p143
        %p276 = pneg %p140
        %s277 = sand.u32 %s28, 1
        %s278 = scalar_lea.sflag [#allocation9], %s277
        %s279 = sand.u32 %s130, 1
        %s280 = smul.addr %s279, 4
        %s281 = scalar_lea.vmem [#allocation8], %s280
        %p282 = pneg %p169
        %p283 = pneg %p166
        %s284 = sand.u32 %s28, 1
        %s285 = scalar_lea.sflag [#allocation9], %s284
        %s286 = sand.u32 %s156, 1
        %s287 = scalar_lea.vmem [#allocation10], %s286
        %p288 = scmp.eq.s32.totalorder %s33, 0
        // Predicated region
        $region37: #{tpu_custom_call.1} parent=27 // pred_check
          %p289 = pneg %p288
        $region38: #{tpu_custom_call.1} parent=27 // pred_check_branch
          %291 = sbr.rel (%p289) target = $region40
        $region39: #{tpu_custom_call.1} parent=27 // pred_region
          %292 = vst [vmem:[%s274] sm:$0xf] 0.0
          %293 = vst [vmem:[%s281] sm:$0xf] 0.0
          %294 = vst [vmem:[%s287] sm:$0x1] 0.0
        $region40: #{tpu_custom_call.1} parent=27 // pred_fallthru
          _
        %v295 = vld [vmem:[%s240] sm:$0x3]
        %vm296 = vcmp.lt.s32.totalorder %v295, 4
        %v297 = vld [vmem:[%s249] sm:$0x3]
        %s298 = scalar_lea.vmem %s249, 2 [#allocation5]
        %v299 = vld [vmem:[%s298] sm:$0x3]
        %s300 = scalar_lea.vmem %s249, 4 [#allocation5]
        %v301 = vld [vmem:[%s300] sm:$0x3]
        %s302 = scalar_lea.vmem %s249, 6 [#allocation5]
        %v303 = vld [vmem:[%s302] sm:$0x3]
        %v304 = vmax.f32 %v297, %v299
        %v305 = vmax.f32 %v304, %v301
        %v306 = vmax.f32 %v305, %v303
        %v307 = vsub.f32 %v297, %v306
        %v308 = vsub.f32 %v299, %v306
        %v309 = vsub.f32 %v301, %v306
        %v310 = vsub.f32 %v303, %v306
        %v311 = vmul.f32 %v307, 1.442695
        %v312 = vpow.pop %v311
        %v313 = vadd.f32 %v312, 0.0
        %v314 = vadd.f32 %v307, 0.0
        %v315 = vmul.f32 %v308, 1.442695
        %v316 = vpow.pop %v315
        %v317 = vadd.f32 %v313, %v316
        %v318 = vadd.f32 %v314, %v308
        %v319 = vmul.f32 %v309, 1.442695
        %v320 = vpow.pop %v319
        %v321 = vadd.f32 %v317, %v320
        %v322 = vadd.f32 %v318, %v309
        %v323 = vmul.f32 %v310, 1.442695
        %v324 = vpow.pop %v323
        %v325 = vadd.f32 %v321, %v324
        %v326 = vadd.f32 %v322, %v310
        %v327 = vlog2.pop %v325
        %v328 = vmul.f32 %v327, 0.6931472
        %vm329 = vcmp.eq.s32.totalorder %v295, 0
        %v330 = vsel %vm329, %v307, 0.0
        %vm331 = vcmp.eq.s32.totalorder %v295, 1
        %v332 = vsel %vm331, %v308, %v330
        %vm333 = vcmp.eq.s32.totalorder %v295, 2
        %v334 = vsel %vm333, %v309, %v332
        %vm335 = vcmp.eq.s32.totalorder %v295, 3
        %v336 = vsel %vm335, %v310, %v334
        %v337 = vmul.f32 %v336, 0.9
        %v338 = vsub.f32 %v328, %v337
        %v339 = vmul.f32 %v326, 0.025
        %v340 = vsub.f32 %v338, %v339
        %v341 = vsel %vm296, %v340, 0.0
        %v342 = vld [vmem:[%s287] sm:$0x1]
        %vm343 = vcmask 1041408
        %v344 = vsel %vm343, %v341, 0.0
        %v345 = vrot.slane %v344, 4
        %v346 = vadd.f32 %v344, %v345
        %v347 = vrot.slane %v346, 2
        %v348 = vadd.f32 %v346, %v347
        %v349 = vrot.slane %v348, 1
        %v350 = vadd.f32 %v348, %v349
        %v351 = vadd.f32 %v342, %v350
        %352 = vst [vmem:[%s287] sm:$0x1] %v351
        %vm353 = vcmp.ge.f32.partialorder %v310, 0.0
        %v354 = vsel %vm353, 3, 0
        %vm355 = vcmp.ge.f32.partialorder %v309, 0.0
        %v356 = vsel %vm355, 2, %v354
        %vm357 = vcmp.ge.f32.partialorder %v308, 0.0
        %v358 = vsel %vm357, 1, %v356
        %vm359 = vcmp.ge.f32.partialorder %v307, 0.0
        %v360 = vsel %vm359, 0, %v358
        %v361 = vsel %vm329, 1.0, 0.0
        %vm362 = vcmp.eq.s32.totalorder %v360, 0
        %vm363 = vmand %vm362, %vm296
        %v364 = vsel %vm363, 1.0, 0.0
        %v365 = vmul.f32 %v361, %v364
        %v366 = vsel %vm343, %v365, 0.0
        %v367 = vrot.slane %v366, 4
        %v368 = vadd.f32 %v366, %v367
        %v369 = vrot.slane %v368, 2
        %v370 = vadd.f32 %v368, %v369
        %v371 = vrot.slane %v370, 1
        %v372 = vadd.f32 %v370, %v371
        %v373 = vadd.f32 %v361, %v364
        %v374 = vsel %vm343, %v373, 0.0
        %v375 = vrot.slane %v374, 4
        %v376 = vadd.f32 %v374, %v375
        %v377 = vrot.slane %v376, 2
        %v378 = vadd.f32 %v376, %v377
        %v379 = vrot.slane %v378, 1
        %v380 = vadd.f32 %v378, %v379
        %v381 = vsel %vm331, 1.0, 0.0
        %vm382 = vcmp.eq.s32.totalorder %v360, 1
        %vm383 = vmand %vm382, %vm296
        %v384 = vsel %vm383, 1.0, 0.0
        %v385 = vmul.f32 %v381, %v384
        %v386 = vsel %vm343, %v385, 0.0
        %v387 = vrot.slane %v386, 4
        %v388 = vadd.f32 %v386, %v387
        %v389 = vrot.slane %v388, 2
        %v390 = vadd.f32 %v388, %v389
        %v391 = vrot.slane %v390, 1
        %v392 = vadd.f32 %v390, %v391
        %v393 = vadd.f32 %v381, %v384
        %v394 = vsel %vm343, %v393, 0.0
        %v395 = vrot.slane %v394, 4
        %v396 = vadd.f32 %v394, %v395
        %v397 = vrot.slane %v396, 2
        %v398 = vadd.f32 %v396, %v397
        %v399 = vrot.slane %v398, 1
        %v400 = vadd.f32 %v398, %v399
        %v401 = vsel %vm333, 1.0, 0.0
        %vm402 = vcmp.eq.s32.totalorder %v360, 2
        %vm403 = vmand %vm402, %vm296
        %v404 = vsel %vm403, 1.0, 0.0
        %v405 = vmul.f32 %v401, %v404
        %v406 = vsel %vm343, %v405, 0.0
        %v407 = vrot.slane %v406, 4
        %v408 = vadd.f32 %v406, %v407
        %v409 = vrot.slane %v408, 2
        %v410 = vadd.f32 %v408, %v409
        %v411 = vrot.slane %v410, 1
        %v412 = vadd.f32 %v410, %v411
        %v413 = vadd.f32 %v401, %v404
        %v414 = vsel %vm343, %v413, 0.0
        %v415 = vrot.slane %v414, 4
        %v416 = vadd.f32 %v414, %v415
        %v417 = vrot.slane %v416, 2
        %v418 = vadd.f32 %v416, %v417
        %v419 = vrot.slane %v418, 1
        %v420 = vadd.f32 %v418, %v419
        %v421 = vsel %vm335, 1.0, 0.0
        %vm422 = vcmp.eq.s32.totalorder %v360, 3
        %vm423 = vmand %vm422, %vm296
        %v424 = vsel %vm423, 1.0, 0.0
        %v425 = vmul.f32 %v421, %v424
        %v426 = vsel %vm343, %v425, 0.0
        %v427 = vrot.slane %v426, 4
        %v428 = vadd.f32 %v426, %v427
        %v429 = vrot.slane %v428, 2
        %v430 = vadd.f32 %v428, %v429
        %v431 = vrot.slane %v430, 1
        %v432 = vadd.f32 %v430, %v431
        %v433 = vadd.f32 %v421, %v424
        %v434 = vsel %vm343, %v433, 0.0
        %v435 = vrot.slane %v434, 4
        %v436 = vadd.f32 %v434, %v435
        %v437 = vrot.slane %v436, 2
        %v438 = vadd.f32 %v436, %v437
        %v439 = vrot.slane %v438, 1
        %v440 = vadd.f32 %v438, %v439
        %v441 = vld [vmem:[%s274] sm:$0xf]
        %vm442 = vcmask 1040384
        %v443 = vsel %vm442, %v372, %v392
        %v444 = vsel %vm343, %v443, %v412
        %vm445 = vcmask 1042432
        %v446 = vsel %vm445, %v444, %v432
        %v447 = vadd.f32 %v441, %v446
        %448 = vst [vmem:[%s274] sm:$0xf] %v447
        %v449 = vld [vmem:[%s281] sm:$0xf]
        %v450 = vsel %vm442, %v380, %v400
        %v451 = vsel %vm343, %v450, %v420
        %v452 = vsel %vm445, %v451, %v440
        %v453 = vadd.f32 %v449, %v452
        %454 = vst [vmem:[%s281] sm:$0xf] %v453
        %s455 = sand.u32 %s104, 1
        %s456 = scalar_lea.sflag [#allocation4], %s455
        %s457 = sand.u32 %s104, 1
        %s458 = smul.addr %s457, 4
        %s459 = scalar_lea.vmem [#allocation7], %s458
        %s460 = sand.u32 %s28, 1
        %s461 = scalar_lea.sflag [#allocation9], %s460
        %s462 = sand.u32 %s130, 1
        %s463 = smul.addr %s462, 4
        %s464 = scalar_lea.vmem [#allocation8], %s463
        %s465 = sand.u32 %s28, 1
        %s466 = scalar_lea.sflag [#allocation9], %s465
        %s467 = sand.u32 %s156, 1
        %s468 = scalar_lea.vmem [#allocation10], %s467
        // Predicated region
        $region41: #{tpu_custom_call.1} parent=27 // pred_check
          %p469 = pneg %p114
        $region42: #{tpu_custom_call.1} parent=27 // pred_check_branch
          %471 = sbr.rel (%p469) target = $region44
        $region43: #{tpu_custom_call.1} parent=27 // pred_region
          %s473 = ssub.s32 64, 64
          %474 = vsyncadd %s456, %s473
          %s475 = smul.addr %s32, 64
          %s476 = scalar_lea.hbm %s2, %s475
          %s478 = sshll.u32 %s459, 4
          %s479 = int_to_ptr.vmem [resolvable:$true] %s478
          %481 = dma.vmem_to_hbm [thread:$0]  %s479, 64, %s476, %s456
        $region44: #{tpu_custom_call.1} parent=27 // pred_fallthru
          _
        // Predicated region
        $region45: #{tpu_custom_call.1} parent=27 // pred_check
          %p482 = pneg %p140
        $region46: #{tpu_custom_call.1} parent=27 // pred_check_branch
          %484 = sbr.rel (%p482) target = $region48
        $region47: #{tpu_custom_call.1} parent=27 // pred_region
          %s486 = ssub.s32 64, 64
          %487 = vsyncadd %s461, %s486
          %s488 = smul.addr %s32, 64
          %s489 = scalar_lea.hbm %s3, %s488
          %s491 = sshll.u32 %s464, 4
          %s492 = int_to_ptr.vmem [resolvable:$true] %s491
          %494 = dma.vmem_to_hbm [thread:$0]  %s492, 64, %s489, %s461
        $region48: #{tpu_custom_call.1} parent=27 // pred_fallthru
          _
        // Predicated region
        $region49: #{tpu_custom_call.1} parent=27 // pred_check
          %p495 = pneg %p166
        $region50: #{tpu_custom_call.1} parent=27 // pred_check_branch
          %497 = sbr.rel (%p495) target = $region52
        $region51: #{tpu_custom_call.1} parent=27 // pred_region
          %s499 = ssub.s32 16, 16
          %500 = vsyncadd %s466, %s499
          %s501 = smul.addr %s32, 16
          %s502 = scalar_lea.hbm %s4, %s501
          %s504 = sshll.u32 %s468, 4
          %s505 = int_to_ptr.vmem [resolvable:$true] %s504
          %507 = dma.vmem_to_hbm [thread:$0]  %s505, 16, %s502, %s466
        $region52: #{tpu_custom_call.1} parent=27 // pred_fallthru
          _
      $region28: #{tpu_custom_call.1} parent=5 // pred_fallthru
        _
      %p508 = scmp.le.s32.totalorder 2, %s23
      // Predicated region
      $region53: #{tpu_custom_call.1} parent=5 // pred_check
        %p509 = pneg %p508
      $region54: #{tpu_custom_call.1} parent=5 // pred_check_branch
        %511 = sbr.rel (%p509) target = $region56
      $region55: #{tpu_custom_call.1} parent=5 // pred_region
        %s512 = ssub.s32 %s23, 2
        // Predicated region
        $region57: #{tpu_custom_call.1} parent=55 // pred_check
          %p513 = pneg %p120
        $region58: #{tpu_custom_call.1} parent=55 // pred_check_branch
          %515 = sbr.rel (%p513) target = $region60
        $region59: #{tpu_custom_call.1} parent=55 // pred_region
          %s516 = sand.u32 %s105, 1
          %s517 = scalar_lea.sflag [#allocation4], %s516
          %s518 = sand.u32 %s105, 1
          %s519 = smul.addr %s518, 4
          %s520 = scalar_lea.vmem [#allocation7], %s519
          %521 = dma.done %s517, 64
        $region60: #{tpu_custom_call.1} parent=55 // pred_fallthru
          _
        // Predicated region
        $region61: #{tpu_custom_call.1} parent=55 // pred_check
          %p522 = pneg %p146
        $region62: #{tpu_custom_call.1} parent=55 // pred_check_branch
          %524 = sbr.rel (%p522) target = $region64
        $region63: #{tpu_custom_call.1} parent=55 // pred_region
          %s525 = sand.u32 %s29, 1
          %s526 = scalar_lea.sflag [#allocation9], %s525
          %s527 = sand.u32 %s131, 1
          %s528 = smul.addr %s527, 4
          %s529 = scalar_lea.vmem [#allocation8], %s528
          %530 = dma.done %s526, 64
        $region64: #{tpu_custom_call.1} parent=55 // pred_fallthru
          _
        // Predicated region
        $region65: #{tpu_custom_call.1} parent=55 // pred_check
          %p531 = pneg %p172
        $region66: #{tpu_custom_call.1} parent=55 // pred_check_branch
          %533 = sbr.rel (%p531) target = $region68
        $region67: #{tpu_custom_call.1} parent=55 // pred_region
          %s534 = sand.u32 %s29, 1
          %s535 = scalar_lea.sflag [#allocation9], %s534
          %s536 = sand.u32 %s157, 1
          %s537 = scalar_lea.vmem [#allocation10], %s536
          %538 = dma.done %s535, 16
        $region68: #{tpu_custom_call.1} parent=55 // pred_fallthru
          _
      $region56: #{tpu_custom_call.1} parent=5 // pred_fallthru
        _
    $region6: #{tpu_custom_call.1} parent=1 // loop_footer
      %s27 = sadd.s32 1, %s23
    $region7: #{tpu_custom_call.1} parent=1 // loop_footer_branch
      %22 = sbr.rel target = $region3
    $region8: #{tpu_custom_call.1} parent=1 // loop_exit
      _
    %539 = vsyncpa [#allocation3], 1
    %s540 = scalar_lea.sflag [#allocation3], 1
    %541 = vsyncpa %s540, 1
    %542 = vsyncpa [#allocation6], 1
    %s543 = scalar_lea.sflag [#allocation6], 1
    %544 = vsyncpa %s543, 1
    %545 = vsyncpa [#allocation4], 1
    %s546 = scalar_lea.sflag [#allocation4], 1
    %547 = vsyncpa %s546, 1
    %548 = vsyncpa [#allocation9], 1
    %s549 = scalar_lea.sflag [#allocation9], 1
    %550 = vsyncpa %s549, 1

</llo_original>
